<compile_context>
chip_gen: v7x
topology: tpu7x:2x2x1
jax: 0.10.0
libtpu: 0.0.40
codegen_flags: <defaults>
</compile_context>

<pallas_src>
import jax
import jax.numpy as jnp
from jax.experimental import pallas as pl
from jax.experimental.pallas import tpu as pltpu

SIZE0 = 16
SIZE1 = 24
SIZE2 = 8

LANE = 128
SUBLANE = 8

VMEM_LIMIT = 32 * 1024 * 1024     # explicit scoped-VMEM limit (valid on v5e/v6e/v7x)
VMEM_BUDGET = 24 * 1024 * 1024    # what tiles are sized against (headroom vs. limit)
MAX_BM = 1024                     # per measured tile-size curve, 512-1024 is the knee


def _pick_bm(B, width, s_tot):
    """Largest batch tile fitting the VMEM budget.

    Streams (double-buffered by the pipeline): mem tile (bm, width) read and
    fused head outputs (bm, s_tot) write.  Resident (constant index_map, still
    2 buffers each): weight (width, s_tot) + bias (1, s_tot).  All f32.
    """
    resident = 2 * 4 * (width * s_tot + s_tot)
    per_row = 2 * 4 * (width + s_tot)
    avail = max(VMEM_BUDGET - resident, per_row * SUBLANE)
    bm = min(avail // per_row, MAX_BM)
    bm = max(SUBLANE, (bm // SUBLANE) * SUBLANE)
    if B <= bm:
        # Single block: block dim == full array dim, so no 8-row alignment needed.
        return B
    return bm


def _heads3_kernel(mem_ref, w_ref, b_ref, o0_ref, o1_ref, o2_ref):
    # One MXU pass over the concatenated weight, f32 accumulate, bias add in
    # f32, then split the (bm, s0+s1+s2) tile into the three head outputs.
    y = (
        jnp.dot(mem_ref[...], w_ref[...], preferred_element_type=jnp.float32)
        + b_ref[...]
    )
    s0 = o0_ref.shape[1]
    s1 = o1_ref.shape[1]
    o0_ref[...] = y[:, :s0].astype(o0_ref.dtype)
    o1_ref[...] = y[:, s0:s0 + s1].astype(o1_ref.dtype)
    o2_ref[...] = y[:, s0 + s1:].astype(o2_ref.dtype)


def _head1_kernel(mem_ref, w_ref, b_ref, o_ref):
    o_ref[...] = (
        jnp.dot(mem_ref[...], w_ref[...], preferred_element_type=jnp.float32)
        + b_ref[...]
    ).astype(o_ref.dtype)


def fuse_params(w0, b0, w1, b1, w2, b2, *, multitask=True):
    """One-time parameter prep (call at init, NOT per forward).

    Concatenates the three heads along the output dim so the forward does a
    single MXU matmul.  No lane padding is needed because the kernel writes
    per-head full-width outputs.
    """
    if multitask:
        w_cat = jnp.concatenate([w0, w1, w2], axis=1)
        b_cat = jnp.concatenate([b0, b1, b2], axis=1)
        sizes = (w0.shape[1], w1.shape[1], w2.shape[1])
    else:
        w_cat, b_cat, sizes = w2, b2, (w2.shape[1],)
    return w_cat, b_cat, sizes


def basenet_forward(mem, fused_params, *, multitask=True):
    """JAX/Pallas equivalent of BaseNet.forward.

    mem:          (B, width) float32
    fused_params: output of fuse_params(...)
    Returns (y0, y1, y2, mem) for multitask=True, else (None, None, y2, mem).
    """
    w_cat, b_cat, sizes = fused_params
    B, width = mem.shape
    s_tot = w_cat.shape[1]

    bm = _pick_bm(B, width, s_tot)
    grid = (pl.cdiv(B, bm),)           # ragged last block handled by Pallas masking

    mem_spec = pl.BlockSpec((bm, width), lambda i: (i, 0))     # pipelined read stream
    w_spec = pl.BlockSpec((width, s_tot), lambda i: (0, 0))    # resident weights
    b_spec = pl.BlockSpec((1, s_tot), lambda i: (0, 0))        # resident bias
    compiler_params = pltpu.CompilerParams(
        dimension_semantics=("parallel",),   # on v7x consider pltpu.CORE_PARALLEL
        vmem_limit_bytes=VMEM_LIMIT,
    )

    if multitask:
        outs = pl.pallas_call(
            _heads3_kernel,
            out_shape=tuple(jax.ShapeDtypeStruct((B, s), jnp.float32) for s in sizes),
            grid=grid,
            in_specs=[mem_spec, w_spec, b_spec],
            out_specs=tuple(pl.BlockSpec((bm, s), lambda i: (i, 0)) for s in sizes),
            compiler_params=compiler_params,
        )(mem, w_cat, b_cat)
        y0, y1, y2 = outs
        return (y0, y1, y2, mem)       # mem passthrough: no kernel round trip
    else:
        (s2,) = sizes
        y2 = pl.pallas_call(
            _head1_kernel,
            out_shape=jax.ShapeDtypeStruct((B, s2), jnp.float32),
            grid=grid,
            in_specs=[mem_spec, w_spec, b_spec],
            out_specs=pl.BlockSpec((bm, s2), lambda i: (i, 0)),
            compiler_params=compiler_params,
        )(mem, w_cat, b_cat)
        return (None, None, y2, mem)


def init_params(key, width):
    """Deterministic parameter init mimicking nn.Linear shapes.

    PyTorch Linear(width, sizeK) has weight (sizeK, width), bias (sizeK,).
    We store the weight transposed: (width, sizeK); bias as (1, sizeK).
    """
    ks = jax.random.split(key, 6)

    def lin(kw, kb, size):
        bound = 1.0 / jnp.sqrt(width)
        w = jax.random.uniform(kw, (width, size), jnp.float32, -bound, bound)
        b = jax.random.uniform(kb, (1, size), jnp.float32, -bound, bound)
        return w, b

    w0, b0 = lin(ks[0], ks[1], SIZE0)
    w1, b1 = lin(ks[2], ks[3], SIZE1)
    w2, b2 = lin(ks[4], ks[5], SIZE2)
    return w0, b0, w1, b1, w2, b2


if __name__ == "__main__":
    key = jax.random.PRNGKey(0)
    k_mem, k_big, k_params = jax.random.split(key, 3)

    B, width = 8, 32
    mem = jax.random.normal(k_mem, (B, width), jnp.float32)
    w0, b0, w1, b1, w2, b2 = init_params(k_params, width)

    # One-time parameter prep (hoisted out of the forward).
    fused_mt = fuse_params(w0, b0, w1, b1, w2, b2, multitask=True)
    fused_st = fuse_params(w0, b0, w1, b1, w2, b2, multitask=False)

    # Multitask path (the default BaseNet behaviour).
    y0, y1, y2, mem_out = basenet_forward(mem, fused_mt, multitask=True)
    jax.block_until_ready((y0, y1, y2, mem_out))

    # Reference check against plain JAX.
    r0 = mem @ w0 + b0
    r1 = mem @ w1 + b1
    r2 = mem @ w2 + b2
    assert y0.shape == (B, SIZE0) and jnp.allclose(y0, r0, atol=1e-5), "out0 mismatch"
    assert y1.shape == (B, SIZE1) and jnp.allclose(y1, r1, atol=1e-5), "out1 mismatch"
    assert y2.shape == (B, SIZE2) and jnp.allclose(y2, r2, atol=1e-5), "out2 mismatch"
    assert jnp.allclose(mem_out, mem), "mem passthrough mismatch"

    # Non-multitask path only computes the out2 head.
    n0, n1, n2, _ = basenet_forward(mem, fused_st, multitask=False)
    jax.block_until_ready(n2)
    assert n0 is None and n1 is None, "multitask=False should skip out0/out1"
    assert jnp.allclose(n2, r2, atol=1e-5), "out2 (non-multitask) mismatch"

    # Larger ragged batch: exercises the pipelined grid + masked last block
    # (no batch padding / output slicing round trips).
    B2 = 1300
    mem_big = jax.random.normal(k_big, (B2, width), jnp.float32)
    z0, z1, z2, _ = basenet_forward(mem_big, fused_mt, multitask=True)
    jax.block_until_ready((z0, z1, z2))
    assert z0.shape == (B2, SIZE0) and jnp.allclose(z0, mem_big @ w0 + b0, atol=1e-4), "big out0 mismatch"
    assert z1.shape == (B2, SIZE1) and jnp.allclose(z1, mem_big @ w1 + b1, atol=1e-4), "big out1 mismatch"
    assert z2.shape == (B2, SIZE2) and jnp.allclose(z2, mem_big @ w2 + b2, atol=1e-4), "big out2 mismatch"

    print("KERNEL_OK")
</pallas_src>

<mosaic_0001>
module attributes {stable_mosaic.version = 11 : i64} {
  func.func @_heads3_kernel(%arg0: i32, %arg1: memref<8x32xf32, #tpu.memory_space<vmem>>, %arg2: memref<32x48xf32, #tpu.memory_space<vmem>>, %arg3: memref<1x48xf32, #tpu.memory_space<vmem>>, %arg4: memref<8x16xf32, #tpu.memory_space<vmem>>, %arg5: memref<8x24xf32, #tpu.memory_space<vmem>>, %arg6: memref<8x8xf32, #tpu.memory_space<vmem>>) attributes {dimension_semantics = [#tpu.dimension_semantics<parallel>], iteration_bounds = array<i64: 1>, scalar_prefetch = 0 : i64, scratch_operands = 0 : i64, tpu.core_type = #tpu.core_type<tc>, window_params = [{transform_indices = @transform_0, window_bounds = array<i64: 8, 32>}, {pipeline_mode = #tpu.pipeline_mode<synchronous>, transform_indices = @transform_1, window_bounds = array<i64: 32, 48>}, {pipeline_mode = #tpu.pipeline_mode<synchronous>, transform_indices = @transform_2, window_bounds = array<i64: 1, 48>}, {transform_indices = @transform_3, window_bounds = array<i64: 8, 16>}, {transform_indices = @transform_4, window_bounds = array<i64: 8, 24>}, {transform_indices = @transform_5, window_bounds = array<i64: 8, 8>}]} {
    %c0 = arith.constant 0 : index
    %c0_0 = arith.constant 0 : index
    %0 = vector.load %arg1[%c0, %c0_0] : memref<8x32xf32, #tpu.memory_space<vmem>>, vector<8x32xf32>
    %c0_1 = arith.constant 0 : index
    %c0_2 = arith.constant 0 : index
    %1 = vector.load %arg2[%c0_1, %c0_2] : memref<32x48xf32, #tpu.memory_space<vmem>>, vector<32x48xf32>
    %cst = arith.constant dense<0.000000e+00> : vector<8x48xf32>
    %2 = tpu.matmul %0, %1, %cst {dimension_numbers = #tpu.dot_dimension_numbers<[1], [0], [0], [1], [0, 0, 1, 1], [], []>} : vector<8x32xf32>, vector<32x48xf32>, vector<8x48xf32> -> vector<8x48xf32>
    %c0_3 = arith.constant 0 : index
    %c0_4 = arith.constant 0 : index
    %3 = vector.load %arg3[%c0_3, %c0_4] : memref<1x48xf32, #tpu.memory_space<vmem>>, vector<1x48xf32>
    %4 = vector.broadcast %3 : vector<1x48xf32> to vector<8x48xf32>
    %5 = arith.addf %2, %4 : vector<8x48xf32>
    %6 = vector.extract_strided_slice %5 {offsets = [0, 0], sizes = [8, 16], strides = [1, 1]} : vector<8x48xf32> to vector<8x16xf32>
    %c0_5 = arith.constant 0 : index
    %c0_6 = arith.constant 0 : index
    %7 = vector.load %arg4[%c0_5, %c0_6] : memref<8x16xf32, #tpu.memory_space<vmem>>, vector<8x16xf32>
    tpu.vector_store %arg4[%c0_5, %c0_6], %6 {strides = array<i32>} : memref<8x16xf32, #tpu.memory_space<vmem>>, vector<8x16xf32>,
    %8 = vector.extract_strided_slice %5 {offsets = [0, 16], sizes = [8, 24], strides = [1, 1]} : vector<8x48xf32> to vector<8x24xf32>
    %c0_7 = arith.constant 0 : index
    %c0_8 = arith.constant 0 : index
    %9 = vector.load %arg5[%c0_7, %c0_8] : memref<8x24xf32, #tpu.memory_space<vmem>>, vector<8x24xf32>
    tpu.vector_store %arg5[%c0_7, %c0_8], %8 {strides = array<i32>} : memref<8x24xf32, #tpu.memory_space<vmem>>, vector<8x24xf32>,
    %10 = vector.extract_strided_slice %5 {offsets = [0, 40], sizes = [8, 8], strides = [1, 1]} : vector<8x48xf32> to vector<8x8xf32>
    %c0_9 = arith.constant 0 : index
    %c0_10 = arith.constant 0 : index
    %11 = vector.load %arg6[%c0_9, %c0_10] : memref<8x8xf32, #tpu.memory_space<vmem>>, vector<8x8xf32>
    tpu.vector_store %arg6[%c0_9, %c0_10], %10 {strides = array<i32>} : memref<8x8xf32, #tpu.memory_space<vmem>>, vector<8x8xf32>,
    return
  }
  func.func @transform_0(%arg0: i32) -> (i32, i32) {
    %c0_i32 = arith.constant 0 : i32
    %c0_i32_0 = arith.constant 0 : i32
    return %arg0, %c0_i32 : i32, i32
  }
  func.func @transform_1(%arg0: i32) -> (i32, i32) {
    %c0_i32 = arith.constant 0 : i32
    %c0_i32_0 = arith.constant 0 : i32
    %c0_i32_1 = arith.constant 0 : i32
    return %c0_i32, %c0_i32_0 : i32, i32
  }
  func.func @transform_2(%arg0: i32) -> (i32, i32) {
    %c0_i32 = arith.constant 0 : i32
    %c0_i32_0 = arith.constant 0 : i32
    %c0_i32_1 = arith.constant 0 : i32
    return %c0_i32, %c0_i32_0 : i32, i32
  }
  func.func @transform_3(%arg0: i32) -> (i32, i32) {
    %c0_i32 = arith.constant 0 : i32
    %c0_i32_0 = arith.constant 0 : i32
    return %arg0, %c0_i32 : i32, i32
  }
  func.func @transform_4(%arg0: i32) -> (i32, i32) {
    %c0_i32 = arith.constant 0 : i32
    %c0_i32_0 = arith.constant 0 : i32
    return %arg0, %c0_i32 : i32, i32
  }
  func.func @transform_5(%arg0: i32) -> (i32, i32) {
    %c0_i32 = arith.constant 0 : i32
    %c0_i32_0 = arith.constant 0 : i32
    return %arg0, %c0_i32 : i32, i32
  }
}

</mosaic_0001>

<llo_original>
// kernel: tpu_custom_call.1
$region0: #{tpu_custom_call.1}
  #allocation0 [shape = 'u32[]', space=smem, size = 0x4, offset = 0x4, fixed_abs, tag = 'smem constant byte address 0x4 - core index']
  #allocation1 [shape = 'u32[144,128]{1,0:T(1,128)}', space=vmem, size = 0x12000, scoped, tag = 'internal scratch']
  %s0 = inlined_call_operand.hbm [shape: f32[8,32], index: 0, kind: input, shape index: {}]
  %s1 = inlined_call_operand.hbm [shape: f32[32,48], index: 1, kind: input, shape index: {}]
  %s2 = inlined_call_operand.vmem [shape: f32[1,48], index: 2, kind: input, shape index: {}]
  %s3 = inlined_call_operand.hbm [shape: f32[8,16], index: 3, kind: output, shape index: {0}]
  %s4 = inlined_call_operand.hbm [shape: f32[8,24], index: 4, kind: output, shape index: {1}]
  %s5 = inlined_call_operand.hbm [shape: f32[8,8], index: 5, kind: output, shape index: {2}]
  %6 = xla_tuple %s3, %s4, %s5
  %s7 = sld [smem:[#allocation0]]
  $region46: #{tpu_custom_call.1} parent=0
    _
  %s9 = ssub.s32 1, %s7
  %s10 = scalar_select 0, %s9, %s7
  $region1: #{tpu_custom_call.1} parent=0
    #allocation2 [shape = 'u8[4096]{0}', space=vmem, size = 0x1000, scoped, tag = 'input window, operand 0, single buffered']
    #allocation3 [shape = 's32[1]{0}', space=sflag, size = 0x4, scoped, tag = 'scoped memory for tpu_custom_call.1']
    #allocation4 [shape = 's32[1]{0}', space=sflag, size = 0x4, scoped, tag = 'scoped memory for tpu_custom_call.1']
    #allocation5 [shape = 'u8[16384]{0}', space=vmem, size = 0x4000, scoped, tag = 'input window, operand 1, single buffered']
    #allocation6 [shape = 's32[1]{0}', space=sflag, size = 0x4, scoped, tag = 'scoped memory for tpu_custom_call.1']
    #allocation7 [shape = 'u8[4096]{0}', space=vmem, size = 0x1000, scoped, tag = 'output window, operand 0, single buffered']
    #allocation8 [shape = 'u8[4096]{0}', space=vmem, size = 0x1000, scoped, tag = 'output window, operand 1, single buffered']
    #allocation9 [shape = 's32[1]{0}', space=sflag, size = 0x4, scoped, tag = 'scoped memory for tpu_custom_call.1']
    #allocation10 [shape = 'u8[4096]{0}', space=vmem, size = 0x1000, scoped, tag = 'output window, operand 2, single buffered']
    %11 = vsyncpa [#allocation3], 0
    %12 = vsyncpa [#allocation6], 0
    %13 = vsyncpa [#allocation4], 0
    %14 = vsyncpa [#allocation9], 0
    // Predicated region
    $region2: #{tpu_custom_call.1} parent=1 // pred_check
      _
    $region3: #{tpu_custom_call.1} parent=1 // pred_check_branch
      %16 = sbr.rel (0) target = $region5
    $region4: #{tpu_custom_call.1} parent=1 // pred_region
      %s18 = ssub.s32 128, 128
      %19 = vsyncadd [#allocation3], %s18
      %s21 = sshll.u32 [#allocation2], 4
      %s22 = int_to_ptr.vmem [resolvable:$true] %s21
      %24 = dma.hbm_to_vmem [thread:$0]  %s0, 128, %s22, [#allocation3]
    $region5: #{tpu_custom_call.1} parent=1 // pred_fallthru
      _
    // Predicated region
    $region6: #{tpu_custom_call.1} parent=1 // pred_check
      _
    $region7: #{tpu_custom_call.1} parent=1 // pred_check_branch
      %26 = sbr.rel (0) target = $region9
    $region8: #{tpu_custom_call.1} parent=1 // pred_region
      %s28 = ssub.s32 512, 512
      %29 = vsyncadd [#allocation6], %s28
      %s30 = sshll.u32 [#allocation5], 4
      %s31 = int_to_ptr.vmem [resolvable:$true] %s30
      %36 = dma.hbm_to_vmem [thread:$0]  %s1, 512, %s31, [#allocation6], 128, 128, 8
    $region9: #{tpu_custom_call.1} parent=1 // pred_fallthru
      _
    // Predicated region
    $region10: #{tpu_custom_call.1} parent=1 // pred_check
      _
    $region11: #{tpu_custom_call.1} parent=1 // pred_check_branch
      %38 = sbr.rel (0) target = $region13
    $region12: #{tpu_custom_call.1} parent=1 // pred_region
      _
    $region13: #{tpu_custom_call.1} parent=1 // pred_fallthru
      _
    // Predicated region
    $region14: #{tpu_custom_call.1} parent=1 // pred_check
      _
    $region15: #{tpu_custom_call.1} parent=1 // pred_check_branch
      %40 = sbr.rel (0) target = $region17
    $region16: #{tpu_custom_call.1} parent=1 // pred_region
      %41 = dma.done [#allocation3], 128
    $region17: #{tpu_custom_call.1} parent=1 // pred_fallthru
      _
    // Predicated region
    $region18: #{tpu_custom_call.1} parent=1 // pred_check
      _
    $region19: #{tpu_custom_call.1} parent=1 // pred_check_branch
      %43 = sbr.rel (0) target = $region21
    $region20: #{tpu_custom_call.1} parent=1 // pred_region
      %44 = dma.done [#allocation6], 512
    $region21: #{tpu_custom_call.1} parent=1 // pred_fallthru
      _
    %v45 = vld [vmem:[#allocation2] sm:$0xff]
    %v46 = vld [vmem:[#allocation5] sm:$0xff]
    %v47 = vld [vmem:[#allocation5 + $0x8] sm:$0xff]
    %v48 = vld [vmem:[#allocation5 + $0x10] sm:$0xff]
    %v49 = vld [vmem:[#allocation5 + $0x18] sm:$0xff]
    %v50 = vld [vmem:[%s2] sm:$0x1]
    %v52 = vlaneseq
    %v53 = vshrl.u32 %v52, 7
    %v54 = vsub.s32 0, %v53
    %v55 = vrot.slane %v50, %v54
    %vm57 = vcmask 261120
    %v59 = vsel %vm57, %v45, 0
    %61 = vmatprep.subr.mxu0 0.0
    %62 = vmatpush1.msra.mxu0 %v46
    %63 = vmatprep.subr.mxu0 0.0
    %64 = vmatpush1.msra.mxu0 %v47
    %65 = vmatprep.subr.mxu0 0.0
    %66 = vmatpush1.msra.mxu0 %v48
    %67 = vmatprep.subr.mxu0 0.0
    %68 = vmatpush1.msra.mxu0 %v49
    %69 = vmatprep.subr.mxu0 0.0
    %70 = vmatpush1.msra.mxu0 0.0
    %71 = vmatprep.subr.mxu0 0.0
    %72 = vmatpush1.msra.mxu0 0.0
    %73 = vmatprep.subr.mxu0 0.0
    %74 = vmatpush1.msra.mxu0 0.0
    %75 = vmatprep.subr.mxu0 0.0
    %76 = vmatpush1.msra.mxu0 0.0
    %77 = vmatprep.subr.mxu0 0.0
    %78 = vmatpush1.msra.mxu0 0.0
    %79 = vmatprep.subr.mxu0 0.0
    %80 = vmatpush1.msra.mxu0 0.0
    %81 = vmatprep.subr.mxu0 0.0
    %82 = vmatpush1.msra.mxu0 0.0
    %83 = vmatprep.subr.mxu0 0.0
    %84 = vmatpush1.msra.mxu0 0.0
    %85 = vmatprep.subr.mxu0 0.0
    %86 = vmatpush1.msra.mxu0 0.0
    %87 = vmatprep.subr.mxu0 0.0
    %88 = vmatpush1.msra.mxu0 0.0
    %89 = vmatprep.subr.mxu0 0.0
    %90 = vmatpush1.msra.mxu0 0.0
    %91 = vmatprep.subr.mxu0 0.0
    %92 = vmatpush1.msra.mxu0 0.0
    %93 = vmatprep.subr.mxu0 0.0
    %94 = vmatpush1.msra.mxu0 0.0
    %95 = vmatprep.subr.mxu0 0.0
    %96 = vmatpush1.msra.mxu0 0.0
    %97 = vmatprep.subr.mxu0 0.0
    %98 = vmatpush1.msra.mxu0 0.0
    %99 = vmatprep.subr.mxu0 0.0
    %100 = vmatpush1.msra.mxu0 0.0
    %101 = vmatprep.subr.mxu0 0.0
    %102 = vmatpush1.msra.mxu0 0.0
    %103 = vmatprep.subr.mxu0 0.0
    %104 = vmatpush1.msra.mxu0 0.0
    %105 = vmatprep.subr.mxu0 0.0
    %106 = vmatpush1.msra.mxu0 0.0
    %107 = vmatprep.subr.mxu0 0.0
    %108 = vmatpush1.msra.mxu0 0.0
    %109 = vmatprep.subr.mxu0 0.0
    %110 = vmatpush1.msra.mxu0 0.0
    %111 = vmatprep.subr.mxu0 0.0
    %112 = vmatpush1.msra.mxu0 0.0
    %113 = vmatprep.subr.mxu0 0.0
    %114 = vmatpush1.msra.mxu0 0.0
    %115 = vmatprep.subr.mxu0 0.0
    %116 = vmatpush1.msra.mxu0 0.0
    %117 = vmatprep.subr.mxu0 0.0
    %118 = vmatpush1.msra.mxu0 0.0
    %119 = vmatprep.subr.mxu0 0.0
    %120 = vmatpush1.msra.mxu0 0.0
    %121 = vmatprep.subr.mxu0 0.0
    %122 = vmatpush1.msra.mxu0 0.0
    %123 = vmatprep.subr.mxu0 0.0
    %124 = vmatpush1.msra.mxu0 0.0
    %125 = vmatprep.mubr.f32.mxu0 0.0
    %126 = vmatmul.mubr.f32.gmra.mrb[0].mxu0 %v59
    %v127 = vpop.f32.mrb[0].mxu0
    %v128 = vadd.f32 %v55, %v127
    %v129 = vpop.f32.mrb[0].mxu0
    %130 = vdwg.mxu0
    %vm131 = vcmask 130048
    %132 = vst.msk [vmem:[#allocation7] sm:$0xff] %vm131, %v128
    %134 = vrot.lane.b32.xlu0 %v128, 112
    %v135 = vpop.permute.xlu0 %134
    %vm137 = vcmask 195584
    %138 = vst.msk [vmem:[#allocation8] sm:$0xff] %vm137, %v135
    %139 = vrot.lane.b32.xlu0 %v128, 88
    %v140 = vpop.permute.xlu0 %139
    %vm142 = vcmask 64512
    %143 = vst.msk [vmem:[#allocation10] sm:$0xff] %vm142, %v140
    // Predicated region
    $region22: #{tpu_custom_call.1} parent=1 // pred_check
      _
    $region23: #{tpu_custom_call.1} parent=1 // pred_check_branch
      %145 = sbr.rel (0) target = $region25
    $region24: #{tpu_custom_call.1} parent=1 // pred_region
      %s147 = ssub.s32 128, 128
      %148 = vsyncadd [#allocation4], %s147
      %s150 = sshll.u32 [#allocation7], 4
      %s151 = int_to_ptr.vmem [resolvable:$true] %s150
      %153 = dma.vmem_to_hbm [thread:$0]  %s151, 128, %s3, [#allocation4]
    $region25: #{tpu_custom_call.1} parent=1 // pred_fallthru
      _
    // Predicated region
    $region26: #{tpu_custom_call.1} parent=1 // pred_check
      _
    $region27: #{tpu_custom_call.1} parent=1 // pred_check_branch
      %155 = sbr.rel (0) target = $region29
    $region28: #{tpu_custom_call.1} parent=1 // pred_region
      %s157 = ssub.s32 128, 128
      %158 = vsyncadd [#allocation9], %s157
      %s160 = sshll.u32 [#allocation8], 4
      %s161 = int_to_ptr.vmem [resolvable:$true] %s160
      %163 = dma.vmem_to_hbm [thread:$0]  %s161, 128, %s4, [#allocation9]
    $region29: #{tpu_custom_call.1} parent=1 // pred_fallthru
      _
    // Predicated region
    $region30: #{tpu_custom_call.1} parent=1 // pred_check
      _
    $region31: #{tpu_custom_call.1} parent=1 // pred_check_branch
      %165 = sbr.rel (0) target = $region33
    $region32: #{tpu_custom_call.1} parent=1 // pred_region
      %s167 = ssub.s32 128, 128
      %168 = vsyncadd [#allocation9], %s167
      %s170 = sshll.u32 [#allocation10], 4
      %s171 = int_to_ptr.vmem [resolvable:$true] %s170
      %173 = dma.vmem_to_hbm [thread:$0]  %s171, 128, %s5, [#allocation9]
    $region33: #{tpu_custom_call.1} parent=1 // pred_fallthru
      _
    // Predicated region
    $region34: #{tpu_custom_call.1} parent=1 // pred_check
      _
    $region35: #{tpu_custom_call.1} parent=1 // pred_check_branch
      %175 = sbr.rel (0) target = $region37
    $region36: #{tpu_custom_call.1} parent=1 // pred_region
      %176 = dma.done [#allocation4], 128
    $region37: #{tpu_custom_call.1} parent=1 // pred_fallthru
      _
    // Predicated region
    $region38: #{tpu_custom_call.1} parent=1 // pred_check
      _
    $region39: #{tpu_custom_call.1} parent=1 // pred_check_branch
      %178 = sbr.rel (0) target = $region41
    $region40: #{tpu_custom_call.1} parent=1 // pred_region
      %179 = dma.done [#allocation9], 128
    $region41: #{tpu_custom_call.1} parent=1 // pred_fallthru
      _
    // Predicated region
    $region42: #{tpu_custom_call.1} parent=1 // pred_check
      _
    $region43: #{tpu_custom_call.1} parent=1 // pred_check_branch
      %181 = sbr.rel (0) target = $region45
    $region44: #{tpu_custom_call.1} parent=1 // pred_region
      %182 = dma.done [#allocation9], 128
    $region45: #{tpu_custom_call.1} parent=1 // pred_fallthru
      _
    %183 = vsyncpa [#allocation3], 1
    %184 = vsyncpa [#allocation6], 1
    %185 = vsyncpa [#allocation4], 1
    %186 = vsyncpa [#allocation9], 1

</llo_original>
